<compile_context>
chip_gen: v7x
topology: tpu7x:2x2x1
jax: 0.10.0
libtpu: 0.0.40
codegen_flags: <defaults>
</compile_context>

<pallas_src>
import jax
import jax.numpy as jnp
from jax import lax
from jax.experimental import pallas as pl
from jax.experimental.pallas import tpu as pltpu


def _make_kernel(mxu_dtype):
    def kernel(x_ref, wmu_ref, wsig_ref, weps_ref, b_ref, out_ref):
        # Reparameterized weight sample. wmu/wsig are (1, D) (O == 1) and broadcast over
        # the (S*O, D) eps block on the sublane axis -- pure VPU FMA, data stays resident.
        w = wmu_ref[...] + wsig_ref[...] * weps_ref[...]                 # (S*O, D) f32
        # MXU: contract D of both operands -> (S*O, tn). Output lane dim = tn (lane-dense
        # stores, no wrapper transpose needed). f32 accumulation.
        y = lax.dot_general(
            w.astype(mxu_dtype), x_ref[...].astype(mxu_dtype),
            dimension_numbers=(((1,), (1,)), ((), ())),
            preferred_element_type=jnp.float32)                          # (S*O, tn)
        out_ref[...] = y + b_ref[...]                                    # bias: (S*O, 1)
    return kernel


def bayes_lin_cox_forward(x, weight_mu, weight_rho, bias_mu, bias_rho,
                          eps_w, eps_b, *, tile_n=512, mxu_dtype=jnp.float32):
    """
    x          : (n_data, in_features)
    weight_mu  : (out_features, in_features)
    weight_rho : (out_features, in_features)
    bias_mu    : (1, out_features)
    bias_rho   : (1, out_features)
    eps_w      : (n_samples, out_features, in_features)   N(0,1) draws
    eps_b      : (n_samples, 1, out_features)              N(0,1) draws
    returns    : (n_samples, n_data, out_features)
    """
    n_data, in_features = x.shape
    n_samples, out_features, _ = eps_w.shape
    SO = n_samples * out_features

    # --- hoisted, tiny, done once (no per-sample duplication, no EUP work in-kernel) ---
    sigma_w = jax.nn.softplus(weight_rho)                                   # (O, D)
    bias_s = bias_mu[None] + jax.nn.softplus(bias_rho)[None] * eps_b        # (S, 1, O)
    bias_s = jnp.transpose(bias_s, (0, 2, 1)).reshape(SO, 1)                # (S*O, 1)
    eps_w_f = eps_w.reshape(SO, in_features)                                # (S*O, D)

    if out_features == 1:
        # O == 1 (always true for BayesLinCox): kernel broadcasts (1, D) over (S, D).
        wmu_in, wsig_in = weight_mu, sigma_w
    else:
        # General fallback (not hit here): tile mu/sigma to (S*O, D) in the wrapper.
        wmu_in = jnp.broadcast_to(
            weight_mu[None], (n_samples, out_features, in_features)).reshape(SO, in_features)
        wsig_in = jnp.broadcast_to(
            sigma_w[None], (n_samples, out_features, in_features)).reshape(SO, in_features)
    WR = wmu_in.shape[0]

    # --- n_data tiling: full-extent when small, else a multiple of 128 ---
    if n_data <= tile_n:
        tn = n_data
    else:
        tn = max((tile_n // 128) * 128, 128)
    grid = (pl.cdiv(n_data, tn),)

    out_flat = pl.pallas_call(
        _make_kernel(mxu_dtype),
        out_shape=jax.ShapeDtypeStruct((SO, n_data), jnp.float32),
        grid_spec=pltpu.PrefetchScalarGridSpec(
            num_scalar_prefetch=0,
            grid=grid,
            in_specs=[
                pl.BlockSpec((tn, in_features), lambda i: (i, 0)),   # x tile (pipelined)
                pl.BlockSpec((WR, in_features), lambda i: (0, 0)),   # weight_mu (resident)
                pl.BlockSpec((WR, in_features), lambda i: (0, 0)),   # sigma_w   (resident)
                pl.BlockSpec((SO, in_features), lambda i: (0, 0)),   # eps_w     (resident)
                pl.BlockSpec((SO, 1), lambda i: (0, 0)),             # sampled bias
            ],
            out_specs=pl.BlockSpec((SO, tn), lambda i: (0, i)),      # lane-dense output
        ),
        compiler_params=pltpu.CompilerParams(
            dimension_semantics=("parallel",),          # shards n_data tiles on v7x's 2 TCs
            vmem_limit_bytes=48 * 1024 * 1024),         # explicit budget; fits v7x's 64 MiB
    )(x, wmu_in, wsig_in, eps_w_f, bias_s)

    # (S*O, n_data) -> torch layout (S, n_data, O). Free reshape when O == 1.
    if out_features == 1:
        return out_flat.reshape(n_samples, n_data, 1)
    return jnp.transpose(out_flat.reshape(n_samples, out_features, n_data), (0, 2, 1))


def _reference(x, weight_mu, weight_rho, bias_mu, bias_rho, eps_w, eps_b):
    """Pure-JAX reference of the same math (einsum('bij,bkj->bik') + bias)."""
    n_data, in_features = x.shape
    n_samples, out_features, _ = eps_w.shape
    sigma_w = jax.nn.softplus(weight_rho)
    sigma_b = jax.nn.softplus(bias_rho)
    weight = weight_mu[None] + sigma_w[None] * eps_w                  # (S, O, D)
    bias = bias_mu[None] + sigma_b[None] * eps_b                      # (S, 1, O)
    x_exp = jnp.broadcast_to(x[None], (n_samples, n_data, in_features))
    return jnp.einsum('bij,bkj->bik', x_exp, weight) + jnp.broadcast_to(
        bias, (n_samples, n_data, out_features))


if __name__ == "__main__":
    # Small, deterministic setup consistent with BayesLinCox(in_features, config)
    in_features = 32      # self.in_features
    out_features = 1      # BayesianLinear(in_features, 1)
    n_samples = 4         # n_samples argument to forward
    rho_scale = -5.0      # config.rho_scale

    key = jax.random.PRNGKey(0)
    k_x, k_wmu, k_ew, k_eb, k_x2 = jax.random.split(key, 5)

    limit = jnp.sqrt(6.0 / (in_features + out_features))
    weight_mu = jax.random.uniform(k_wmu, (out_features, in_features),
                                   minval=-limit, maxval=limit, dtype=jnp.float32)
    weight_rho = jnp.full((out_features, in_features), rho_scale, dtype=jnp.float32)
    bias_mu = jnp.zeros((1, out_features), dtype=jnp.float32)
    bias_rho = jnp.full((1, out_features), rho_scale, dtype=jnp.float32)

    # Reparameterization noise (stands in for ParametrizedGaussian's epsilon draws)
    eps_w = jax.random.normal(k_ew, (n_samples, out_features, in_features), dtype=jnp.float32)
    eps_b = jax.random.normal(k_eb, (n_samples, 1, out_features), dtype=jnp.float32)

    # --- Case A: small single-tile problem, f32 MXU feed ---
    n_data_a = 8
    x_a = jax.random.normal(k_x, (n_data_a, in_features), dtype=jnp.float32)
    out_a = jax.block_until_ready(bayes_lin_cox_forward(
        x_a, weight_mu, weight_rho, bias_mu, bias_rho, eps_w, eps_b))
    ref_a = _reference(x_a, weight_mu, weight_rho, bias_mu, bias_rho, eps_w, eps_b)
    assert out_a.shape == (n_samples, n_data_a, out_features)
    assert jnp.allclose(out_a, ref_a, atol=1e-4, rtol=1e-4)

    # --- Case B: multi-tile grid over n_data (exercises the parallel pipeline), f32 ---
    n_data_b = 384
    x_b = jax.random.normal(k_x2, (n_data_b, in_features), dtype=jnp.float32)
    out_b = jax.block_until_ready(bayes_lin_cox_forward(
        x_b, weight_mu, weight_rho, bias_mu, bias_rho, eps_w, eps_b, tile_n=128))
    ref_b = _reference(x_b, weight_mu, weight_rho, bias_mu, bias_rho, eps_w, eps_b)
    assert out_b.shape == (n_samples, n_data_b, out_features)
    assert jnp.allclose(out_b, ref_b, atol=1e-4, rtol=1e-4)

    # --- Case C: bf16 MXU feed (v6e/v7x fast path); looser tolerance vs f32 reference ---
    out_c = jax.block_until_ready(bayes_lin_cox_forward(
        x_a, weight_mu, weight_rho, bias_mu, bias_rho, eps_w, eps_b,
        mxu_dtype=jnp.bfloat16))
    assert jnp.allclose(out_c, ref_a, atol=5e-2, rtol=5e-2)

    print("KERNEL_OK")
</pallas_src>

<mosaic_0001>
module attributes {stable_mosaic.version = 11 : i64} {
  func.func @kernel(%arg0: i32, %arg1: memref<8x32xf32, #tpu.memory_space<vmem>>, %arg2: memref<1x32xf32, #tpu.memory_space<vmem>>, %arg3: memref<1x32xf32, #tpu.memory_space<vmem>>, %arg4: memref<4x32xf32, #tpu.memory_space<vmem>>, %arg5: memref<4x1xf32, #tpu.memory_space<vmem>>, %arg6: memref<4x8xf32, #tpu.memory_space<vmem>>) attributes {dimension_semantics = [#tpu.dimension_semantics<parallel>], iteration_bounds = array<i64: 1>, scalar_prefetch = 0 : i64, scratch_operands = 0 : i64, tpu.core_type = #tpu.core_type<tc>, window_params = [{transform_indices = @transform_0, window_bounds = array<i64: 8, 32>}, {pipeline_mode = #tpu.pipeline_mode<synchronous>, transform_indices = @transform_1, window_bounds = array<i64: 1, 32>}, {pipeline_mode = #tpu.pipeline_mode<synchronous>, transform_indices = @transform_2, window_bounds = array<i64: 1, 32>}, {pipeline_mode = #tpu.pipeline_mode<synchronous>, transform_indices = @transform_3, window_bounds = array<i64: 4, 32>}, {pipeline_mode = #tpu.pipeline_mode<synchronous>, transform_indices = @transform_4, window_bounds = array<i64: 4, 1>}, {transform_indices = @transform_5, window_bounds = array<i64: 4, 8>}]} {
    %c0 = arith.constant 0 : index
    %c0_0 = arith.constant 0 : index
    %0 = vector.load %arg2[%c0, %c0_0] : memref<1x32xf32, #tpu.memory_space<vmem>>, vector<1x32xf32>
    %c0_1 = arith.constant 0 : index
    %c0_2 = arith.constant 0 : index
    %1 = vector.load %arg3[%c0_1, %c0_2] : memref<1x32xf32, #tpu.memory_space<vmem>>, vector<1x32xf32>
    %c0_3 = arith.constant 0 : index
    %c0_4 = arith.constant 0 : index
    %2 = vector.load %arg4[%c0_3, %c0_4] : memref<4x32xf32, #tpu.memory_space<vmem>>, vector<4x32xf32>
    %3 = vector.broadcast %1 : vector<1x32xf32> to vector<4x32xf32>
    %4 = arith.mulf %3, %2 : vector<4x32xf32>
    %5 = vector.broadcast %0 : vector<1x32xf32> to vector<4x32xf32>
    %6 = arith.addf %5, %4 : vector<4x32xf32>
    %c0_5 = arith.constant 0 : index
    %c0_6 = arith.constant 0 : index
    %7 = vector.load %arg1[%c0_5, %c0_6] : memref<8x32xf32, #tpu.memory_space<vmem>>, vector<8x32xf32>
    %cst = arith.constant dense<0.000000e+00> : vector<4x8xf32>
    %8 = tpu.matmul %6, %7, %cst {dimension_numbers = #tpu.dot_dimension_numbers<[1], [1], [0], [0], [0, 0, 1, 0], [], []>} : vector<4x32xf32>, vector<8x32xf32>, vector<4x8xf32> -> vector<4x8xf32>
    %c0_7 = arith.constant 0 : index
    %c0_8 = arith.constant 0 : index
    %9 = vector.load %arg5[%c0_7, %c0_8] : memref<4x1xf32, #tpu.memory_space<vmem>>, vector<4x1xf32>
    %10 = vector.broadcast %9 : vector<4x1xf32> to vector<4x8xf32>
    %11 = arith.addf %8, %10 : vector<4x8xf32>
    %c0_9 = arith.constant 0 : index
    %c0_10 = arith.constant 0 : index
    %12 = vector.load %arg6[%c0_9, %c0_10] : memref<4x8xf32, #tpu.memory_space<vmem>>, vector<4x8xf32>
    tpu.vector_store %arg6[%c0_9, %c0_10], %11 {strides = array<i32>} : memref<4x8xf32, #tpu.memory_space<vmem>>, vector<4x8xf32>,
    return
  }
  func.func @transform_0(%arg0: i32) -> (i32, i32) {
    %c0_i32 = arith.constant 0 : i32
    %c0_i32_0 = arith.constant 0 : i32
    return %arg0, %c0_i32 : i32, i32
  }
  func.func @transform_1(%arg0: i32) -> (i32, i32) {
    %c0_i32 = arith.constant 0 : i32
    %c0_i32_0 = arith.constant 0 : i32
    %c0_i32_1 = arith.constant 0 : i32
    return %c0_i32, %c0_i32_0 : i32, i32
  }
  func.func @transform_2(%arg0: i32) -> (i32, i32) {
    %c0_i32 = arith.constant 0 : i32
    %c0_i32_0 = arith.constant 0 : i32
    %c0_i32_1 = arith.constant 0 : i32
    return %c0_i32, %c0_i32_0 : i32, i32
  }
  func.func @transform_3(%arg0: i32) -> (i32, i32) {
    %c0_i32 = arith.constant 0 : i32
    %c0_i32_0 = arith.constant 0 : i32
    %c0_i32_1 = arith.constant 0 : i32
    return %c0_i32, %c0_i32_0 : i32, i32
  }
  func.func @transform_4(%arg0: i32) -> (i32, i32) {
    %c0_i32 = arith.constant 0 : i32
    %c0_i32_0 = arith.constant 0 : i32
    %c0_i32_1 = arith.constant 0 : i32
    return %c0_i32, %c0_i32_0 : i32, i32
  }
  func.func @transform_5(%arg0: i32) -> (i32, i32) {
    %c0_i32 = arith.constant 0 : i32
    %c0_i32_0 = arith.constant 0 : i32
    return %c0_i32, %arg0 : i32, i32
  }
}

</mosaic_0001>

<llo_original>
// kernel: tpu_custom_call.1
$region0: #{tpu_custom_call.1}
  #allocation0 [shape = 'u32[]', space=smem, size = 0x4, offset = 0x4, fixed_abs, tag = 'smem constant byte address 0x4 - core index']
  #allocation1 [shape = 'u32[144,128]{1,0:T(1,128)}', space=vmem, size = 0x12000, scoped, tag = 'internal scratch']
  %s0 = inlined_call_operand.hbm [shape: f32[8,32], index: 0, kind: input, shape index: {}]
  %s1 = inlined_call_operand.vmem [shape: f32[1,32], index: 1, kind: input, shape index: {}]
  %s2 = inlined_call_operand.vmem [shape: f32[1,32], index: 2, kind: input, shape index: {}]
  %s3 = inlined_call_operand.vmem [shape: f32[4,32], index: 3, kind: input, shape index: {}]
  %s4 = inlined_call_operand.vmem [shape: f32[4,1], index: 4, kind: input, shape index: {}]
  %s5 = inlined_call_operand.hbm [shape: f32[4,8], index: 5, kind: output, shape index: {}]
  %s6 = sld [smem:[#allocation0]]
  $region34: #{tpu_custom_call.1} parent=0
    _
  %s8 = ssub.s32 1, %s6
  %s9 = scalar_select 0, %s8, %s6
  $region1: #{tpu_custom_call.1} parent=0
    #allocation2 [shape = 'u8[4096]{0}', space=vmem, size = 0x1000, scoped, tag = 'input window, operand 0, single buffered']
    #allocation3 [shape = 's32[1]{0}', space=sflag, size = 0x4, scoped, tag = 'scoped memory for tpu_custom_call.1']
    #allocation4 [shape = 's32[1]{0}', space=sflag, size = 0x4, scoped, tag = 'scoped memory for tpu_custom_call.1']
    #allocation5 [shape = 'u8[2048]{0}', space=vmem, size = 0x800, scoped, tag = 'output window, operand 0, single buffered']
    %10 = vsyncpa [#allocation3], 0
    %11 = vsyncpa [#allocation4], 0
    // Predicated region
    $region2: #{tpu_custom_call.1} parent=1 // pred_check
      _
    $region3: #{tpu_custom_call.1} parent=1 // pred_check_branch
      %13 = sbr.rel (0) target = $region5
    $region4: #{tpu_custom_call.1} parent=1 // pred_region
      %s15 = ssub.s32 128, 128
      %16 = vsyncadd [#allocation3], %s15
      %s18 = sshll.u32 [#allocation2], 4
      %s19 = int_to_ptr.vmem [resolvable:$true] %s18
      %21 = dma.hbm_to_vmem [thread:$0]  %s0, 128, %s19, [#allocation3]
    $region5: #{tpu_custom_call.1} parent=1 // pred_fallthru
      _
    // Predicated region
    $region6: #{tpu_custom_call.1} parent=1 // pred_check
      _
    $region7: #{tpu_custom_call.1} parent=1 // pred_check_branch
      %23 = sbr.rel (0) target = $region9
    $region8: #{tpu_custom_call.1} parent=1 // pred_region
      _
    $region9: #{tpu_custom_call.1} parent=1 // pred_fallthru
      _
    // Predicated region
    $region10: #{tpu_custom_call.1} parent=1 // pred_check
      _
    $region11: #{tpu_custom_call.1} parent=1 // pred_check_branch
      %25 = sbr.rel (0) target = $region13
    $region12: #{tpu_custom_call.1} parent=1 // pred_region
      _
    $region13: #{tpu_custom_call.1} parent=1 // pred_fallthru
      _
    // Predicated region
    $region14: #{tpu_custom_call.1} parent=1 // pred_check
      _
    $region15: #{tpu_custom_call.1} parent=1 // pred_check_branch
      %27 = sbr.rel (0) target = $region17
    $region16: #{tpu_custom_call.1} parent=1 // pred_region
      _
    $region17: #{tpu_custom_call.1} parent=1 // pred_fallthru
      _
    // Predicated region
    $region18: #{tpu_custom_call.1} parent=1 // pred_check
      _
    $region19: #{tpu_custom_call.1} parent=1 // pred_check_branch
      %29 = sbr.rel (0) target = $region21
    $region20: #{tpu_custom_call.1} parent=1 // pred_region
      _
    $region21: #{tpu_custom_call.1} parent=1 // pred_fallthru
      _
    // Predicated region
    $region22: #{tpu_custom_call.1} parent=1 // pred_check
      _
    $region23: #{tpu_custom_call.1} parent=1 // pred_check_branch
      %31 = sbr.rel (0) target = $region25
    $region24: #{tpu_custom_call.1} parent=1 // pred_region
      %32 = dma.done [#allocation3], 128
    $region25: #{tpu_custom_call.1} parent=1 // pred_fallthru
      _
    %v33 = vld [vmem:[%s1] sm:$0x1]
    %v34 = vld [vmem:[%s2] sm:$0x1]
    %v35 = vld [vmem:[%s3] sm:$0xf]
    %v37 = vlaneseq
    %v38 = vshrl.u32 %v37, 7
    %v39 = vsub.s32 0, %v38
    %v40 = vrot.slane %v34, %v39
    %v42 = vmul.f32 %v40, %v35
    %v44 = vlaneseq
    %v45 = vshrl.u32 %v44, 7
    %v46 = vsub.s32 0, %v45
    %v47 = vrot.slane %v33, %v46
    %v49 = vadd.f32 %v47, %v42
    %v50 = vld [vmem:[#allocation2] sm:$0xff]
    %v51 = vld [vmem:[%s4] sm:$0xf]
    %53 = vset.pattern.permute.xlu0 0
    %54 = vperm.xlu0 %53, %v51
    %v55 = vpop.permute.xlu0 %54
    %vm57 = vcmask 261120
    %v59 = vsel %vm57, %v49, 0
    %v62 = vsel %vm57, %v50, 0
    %64 = vmatprep.subr.mxu0 0.0
    %65 = vmatpush1.xpose.msra.mxu0 %v62
    %66 = vmatprep.subr.mxu0 0.0
    %67 = vmatpush1.xpose.msra.mxu0 0.0
    %68 = vmatprep.subr.mxu0 0.0
    %69 = vmatpush1.xpose.msra.mxu0 0.0
    %70 = vmatprep.subr.mxu0 0.0
    %71 = vmatpush1.xpose.msra.mxu0 0.0
    %72 = vmatprep.subr.mxu0 0.0
    %73 = vmatpush1.xpose.msra.mxu0 0.0
    %74 = vmatprep.subr.mxu0 0.0
    %75 = vmatpush1.xpose.msra.mxu0 0.0
    %76 = vmatprep.subr.mxu0 0.0
    %77 = vmatpush1.xpose.msra.mxu0 0.0
    %78 = vmatprep.subr.mxu0 0.0
    %79 = vmatpush1.xpose.msra.mxu0 0.0
    %80 = vmatprep.subr.mxu0 0.0
    %81 = vmatpush1.xpose.msra.mxu0 0.0
    %82 = vmatprep.subr.mxu0 0.0
    %83 = vmatpush1.xpose.msra.mxu0 0.0
    %84 = vmatprep.subr.mxu0 0.0
    %85 = vmatpush1.xpose.msra.mxu0 0.0
    %86 = vmatprep.subr.mxu0 0.0
    %87 = vmatpush1.xpose.msra.mxu0 0.0
    %88 = vmatprep.subr.mxu0 0.0
    %89 = vmatpush1.xpose.msra.mxu0 0.0
    %90 = vmatprep.subr.mxu0 0.0
    %91 = vmatpush1.xpose.msra.mxu0 0.0
    %92 = vmatprep.subr.mxu0 0.0
    %93 = vmatpush1.xpose.msra.mxu0 0.0
    %94 = vmatprep.subr.mxu0 0.0
    %95 = vmatpush1.xpose.msra.mxu0 0.0
    %96 = vmatprep.subr.mxu0 0.0
    %97 = vmatpush1.xpose.msra.mxu0 0.0
    %98 = vmatprep.subr.mxu0 0.0
    %99 = vmatpush1.xpose.msra.mxu0 0.0
    %100 = vmatprep.subr.mxu0 0.0
    %101 = vmatpush1.xpose.msra.mxu0 0.0
    %102 = vmatprep.subr.mxu0 0.0
    %103 = vmatpush1.xpose.msra.mxu0 0.0
    %104 = vmatprep.subr.mxu0 0.0
    %105 = vmatpush1.xpose.msra.mxu0 0.0
    %106 = vmatprep.subr.mxu0 0.0
    %107 = vmatpush1.xpose.msra.mxu0 0.0
    %108 = vmatprep.subr.mxu0 0.0
    %109 = vmatpush1.xpose.msra.mxu0 0.0
    %110 = vmatprep.subr.mxu0 0.0
    %111 = vmatpush1.xpose.msra.mxu0 0.0
    %112 = vmatprep.subr.mxu0 0.0
    %113 = vmatpush1.xpose.msra.mxu0 0.0
    %114 = vmatprep.subr.mxu0 0.0
    %115 = vmatpush1.xpose.msra.mxu0 0.0
    %116 = vmatprep.subr.mxu0 0.0
    %117 = vmatpush1.xpose.msra.mxu0 0.0
    %118 = vmatprep.subr.mxu0 0.0
    %119 = vmatpush1.xpose.msra.mxu0 0.0
    %120 = vmatprep.subr.mxu0 0.0
    %121 = vmatpush1.xpose.msra.mxu0 0.0
    %122 = vmatprep.subr.mxu0 0.0
    %123 = vmatpush1.xpose.msra.mxu0 0.0
    %124 = vmatprep.subr.mxu0 0.0
    %125 = vmatpush1.xpose.msra.mxu0 0.0
    %126 = vmatprep.subr.mxu0 0.0
    %127 = vmatpush1.xpose.msra.mxu0 0.0
    %128 = vmatprep.mubr.f32.mxu0 0.0
    %129 = vmatmul.mubr.f32.gmra.mrb[0].mxu0 %v59
    %v130 = vpop.f32.mrb[0].mxu0
    %v131 = vadd.f32 %v55, %v130
    %v132 = vpop.f32.mrb[0].mxu0
    %133 = vdwg.mxu0
    %vm134 = vcmask 60416
    %135 = vst.msk [vmem:[#allocation5] sm:$0xf] %vm134, %v131
    // Predicated region
    $region26: #{tpu_custom_call.1} parent=1 // pred_check
      _
    $region27: #{tpu_custom_call.1} parent=1 // pred_check_branch
      %137 = sbr.rel (0) target = $region29
    $region28: #{tpu_custom_call.1} parent=1 // pred_region
      %s139 = ssub.s32 64, 64
      %140 = vsyncadd [#allocation4], %s139
      %s142 = sshll.u32 [#allocation5], 4
      %s143 = int_to_ptr.vmem [resolvable:$true] %s142
      %145 = dma.vmem_to_hbm [thread:$0]  %s143, 64, %s5, [#allocation4]
    $region29: #{tpu_custom_call.1} parent=1 // pred_fallthru
      _
    // Predicated region
    $region30: #{tpu_custom_call.1} parent=1 // pred_check
      _
    $region31: #{tpu_custom_call.1} parent=1 // pred_check_branch
      %147 = sbr.rel (0) target = $region33
    $region32: #{tpu_custom_call.1} parent=1 // pred_region
      %148 = dma.done [#allocation4], 64
    $region33: #{tpu_custom_call.1} parent=1 // pred_fallthru
      _
    %149 = vsyncpa [#allocation3], 1
    %150 = vsyncpa [#allocation4], 1

</llo_original>
